<compile_context>
chip_gen: v7x
topology: tpu7x:2x2x1
jax: 0.10.0
libtpu: 0.0.40
codegen_flags: <defaults>
</compile_context>

<pallas_src>
import functools

import jax
import jax.numpy as jnp
from jax.experimental import pallas as pl
from jax.experimental.pallas import tpu as pltpu

EPS = 1e-12  # torch.nn.functional.normalize default eps


def _round_up(x, m):
    return ((x + m - 1) // m) * m


def _choose_tiling(n_pts, tile_n, chunk_n, min_grid_steps=8):
    """Pick (dma_tile, compute_chunk, padded_n); all multiples of 128.

    dma_tile is a multiple of compute_chunk; padded_n a multiple of dma_tile.
    The tile is capped so the grid keeps >= min_grid_steps steps when the
    problem is large enough (feeds both TensorCores on v7x megacore).
    """
    nr = _round_up(max(n_pts, 1), 128)
    chunk = min(_round_up(chunk_n, 128), nr)
    tile = min(_round_up(tile_n, chunk), _round_up(nr, chunk))
    if nr > min_grid_steps * chunk:
        tile = min(tile, _round_up(-(-nr // min_grid_steps), chunk))
    tile = max(tile, chunk)
    return tile, chunk, _round_up(nr, tile)


def ambient_reflection_kernel(x_ref, w1t_ref, b1_ref, w2t_ref, b2_ref, out_ref,
                              *, chunk):
    # x_ref: (8, T) feature-major slab: rows 0:3 normals, 3:6 view_dirs,
    #        6 roughness, 7 r0.   out_ref: (8, T): rows 0:3 diffuse, 3:6 spec.
    tile = x_ref.shape[1]
    nchunks = tile // chunk

    def body(c, carry):
        off = c * chunk
        if not isinstance(off, int):
            off = pl.multiple_of(off, 128)

        x = x_ref[:, pl.ds(off, chunk)].astype(jnp.float32)     # (8, C)
        n = x[0:3, :]
        v = x[3:6, :]

        n2 = jnp.sum(n * n, axis=0, keepdims=True)               # (1, C)
        v2 = jnp.sum(v * v, axis=0, keepdims=True)                # (1, C)
        ndotv = jnp.sum(n * v, axis=0, keepdims=True)             # (1, C)

        # F.normalize: x / max(||x||, eps) == x * rsqrt(max(||x||^2, eps^2))
        inv_n = jax.lax.rsqrt(jnp.maximum(n2, EPS * EPS))
        inv_v = jax.lax.rsqrt(jnp.maximum(v2, EPS * EPS))

        # Per-row scale via sublane iota select: rows 0:3 -> inv_n,
        # rows 3:6 -> inv_v, rows 6:8 -> 1 (roughness / r0 untouched).
        row = jax.lax.broadcasted_iota(jnp.int32, x.shape, 0)
        scale = jnp.where(row < 3, inv_n, jnp.where(row < 6, inv_v, 1.0))
        spec_in = x * scale                                       # (8, C)

        # sign(n̂·v̂) == sign(n·v) since the normalization scales are > 0.
        visible = ndotv > 0.0                                     # (1, C)

        # Fused MLPs (diffuse columns see only the first 3 rows via zero pad):
        #   h   = relu(W1ᵀ @ spec_in + b1)   (2H, C)
        #   rgb = W2ᵀ @ h + b2               (8,  C)  rows 0:3 diff, 3:6 spec
        h = jnp.maximum(
            jnp.dot(w1t_ref[...], spec_in, preferred_element_type=jnp.float32)
            + b1_ref[...], 0.0)
        rgb = (jnp.dot(w2t_ref[...], h, preferred_element_type=jnp.float32)
               + b2_ref[...])

        out_ref[:, pl.ds(off, chunk)] = jnp.where(
            visible, rgb, 0.0).astype(out_ref.dtype)
        return carry

    if nchunks == 1:
        body(0, 0)
    else:
        jax.lax.fori_loop(0, nchunks, body, 0)


def _ambient_reflection_core(x_fm, packed_params, tile_n, chunk_n):
    """x_fm: (8, N) feature-major. Returns padded (8, Np) feature-major out."""
    w1t, b1, w2t, b2 = packed_params
    n_pts = x_fm.shape[1]
    tile, chunk, n_pad = _choose_tiling(n_pts, tile_n, chunk_n)
    if n_pad != n_pts:
        x_fm = jnp.pad(x_fm, ((0, 0), (0, n_pad - n_pts)))

    def full_spec(a):
        return pl.BlockSpec(a.shape, lambda i: (0, 0))

    kernel = functools.partial(ambient_reflection_kernel, chunk=chunk)
    out = pl.pallas_call(
        kernel,
        out_shape=jax.ShapeDtypeStruct((8, n_pad), x_fm.dtype),
        grid_spec=pltpu.PrefetchScalarGridSpec(
            num_scalar_prefetch=0,
            grid=(n_pad // tile,),
            in_specs=[
                pl.BlockSpec((8, tile), lambda i: (0, i)),   # packed inputs
                full_spec(w1t), full_spec(b1),
                full_spec(w2t), full_spec(b2),
            ],
            out_specs=pl.BlockSpec((8, tile), lambda i: (0, i)),
        ),
        compiler_params=pltpu.CompilerParams(
            dimension_semantics=("parallel",),
            vmem_limit_bytes=32 * 1024 * 1024),
    )(x_fm, w1t, b1, w2t, b2)
    return out


@functools.partial(jax.jit, static_argnames=("tile_n", "chunk_n"))
def ambient_reflection_net_fm(x_fm, packed_params, tile_n=16384, chunk_n=2048):
    """Feature-major entry point (no wrapper layout passes).

    x_fm: (8, N) rows = [normals(3) | view_dirs(3) | roughness(1) | r0(1)].
    Returns (8, N): rows 0:3 diffuse_rgb, rows 3:6 specular_rgb, rows 6:8 zero.
    """
    n_pts = x_fm.shape[1]
    out = _ambient_reflection_core(x_fm, packed_params, tile_n, chunk_n)
    return out[:, :n_pts]


@functools.partial(jax.jit, static_argnames=("tile_n", "chunk_n"))
def ambient_reflection_net(normals, view_dirs, roughness, r0, packed_params,
                           tile_n=16384, chunk_n=2048):
    """Point-major wrapper matching the PyTorch module's calling convention."""
    assert roughness.shape[-1] == 1 and r0.shape[-1] == 1
    n_pts = normals.shape[0]
    # ONE fused layout pass to the lane-dense feature-major (8, N) slab.
    x_fm = jnp.concatenate(
        [normals.T, view_dirs.T, roughness.T, r0.T], axis=0)      # (8, N)
    out = _ambient_reflection_core(x_fm, packed_params, tile_n, chunk_n)
    # ONE transposed slice of the results; the final split is along the small
    # last axis and is cheap.
    rgb = out[0:6, :n_pts].T                                      # (N, 6)
    return rgb[:, 0:3], rgb[:, 3:6]


def init_params(hidden=32, dtype=jnp.float32):
    """Deterministic synthetic MLP parameters.

    diffuse_mlp : Linear(3 -> H) -> ReLU -> Linear(H -> 3)
    specular_mlp: Linear(8 -> H) -> ReLU -> Linear(H -> 3)
    """
    key = jax.random.PRNGKey(42)
    ks = jax.random.split(key, 8)
    scale = 0.2
    w1d = scale * jax.random.normal(ks[0], (3, hidden), dtype)
    b1d = scale * jax.random.normal(ks[1], (1, hidden), dtype)
    w2d = scale * jax.random.normal(ks[2], (hidden, 3), dtype)
    b2d = scale * jax.random.normal(ks[3], (1, 3), dtype)
    w1s = scale * jax.random.normal(ks[4], (8, hidden), dtype)
    b1s = scale * jax.random.normal(ks[5], (1, hidden), dtype)
    w2s = scale * jax.random.normal(ks[6], (hidden, 3), dtype)
    b2s = scale * jax.random.normal(ks[7], (1, 3), dtype)
    return (w1d, b1d, w2d, b2d, w1s, b1s, w2s, b2s)


def pack_params(params, dtype=jnp.float32):
    """Fuse the two MLPs into one matmul per layer (feature-major weights).

    Layer 1: (8, 2H)   columns 0:H   = W1d zero-padded to 8 input rows,
                        columns H:2H = W1s.
    Layer 2: (2H, 8)   block-diagonal: W2d -> out rows 0:3, W2s -> out rows 3:6,
                        rows 6:8 are zero padding.
    Returned transposed for the (features, points) compute layout.
    """
    (w1d, b1d, w2d, b2d, w1s, b1s, w2s, b2s) = params
    hidden = w1d.shape[1]

    w1 = jnp.zeros((8, 2 * hidden), dtype)
    w1 = w1.at[0:3, 0:hidden].set(w1d.astype(dtype))
    w1 = w1.at[:, hidden:].set(w1s.astype(dtype))
    b1 = jnp.concatenate(
        [b1d.reshape(-1), b1s.reshape(-1)]).astype(dtype).reshape(2 * hidden, 1)

    w2 = jnp.zeros((2 * hidden, 8), dtype)
    w2 = w2.at[0:hidden, 0:3].set(w2d.astype(dtype))
    w2 = w2.at[hidden:, 3:6].set(w2s.astype(dtype))
    b2 = jnp.zeros((8, 1), dtype)
    b2 = b2.at[0:3, 0].set(b2d.reshape(-1).astype(dtype))
    b2 = b2.at[3:6, 0].set(b2s.reshape(-1).astype(dtype))

    return (w1.T, b1, w2.T, b2)   # (2H, 8), (2H, 1), (8, 2H), (8, 1)


def reference(normals, view_dirs, roughness, r0, params):
    """Pure-JAX reference mirroring the PyTorch forward (unfused MLPs)."""
    (w1d, b1d, w2d, b2d, w1s, b1s, w2s, b2s) = params

    def norm(x):
        return x / jnp.maximum(
            jnp.sqrt(jnp.sum(x * x, -1, keepdims=True)), EPS)

    n = norm(normals)
    v = norm(view_dirs)
    spec_in = jnp.concatenate([n, v, roughness, r0], axis=-1)
    visible = jnp.sum(n * v, -1, keepdims=True) > 0

    rgb_d = jnp.maximum(n @ w1d + b1d, 0.0) @ w2d + b2d
    rgb_s = jnp.maximum(spec_in @ w1s + b1s, 0.0) @ w2s + b2s
    zero = jnp.zeros_like(rgb_d)
    return jnp.where(visible, rgb_d, zero), jnp.where(visible, rgb_s, zero)


if __name__ == "__main__":
    HIDDEN = 32
    params = init_params(HIDDEN)
    packed = pack_params(params)

    # (N, tile_n, chunk_n): exercise padding, the in-kernel chunk loop, and a
    # multi-step grid.  N deliberately not a multiple of 128.
    configs = [
        (300, 16384, 2048),    # 1 grid step, 1 chunk, lane padding
        (5000, 16384, 2048),   # 1 grid step, 3 chunks
        (5000, 1024, 1024),    # 6 grid steps (multi-tile pipeline)
    ]

    for n_pts, tile_n, chunk_n in configs:
        key = jax.random.PRNGKey(0)
        k1, k2, k3, k4 = jax.random.split(key, 4)
        normals = jax.random.normal(k1, (n_pts, 3), jnp.float32)
        view_dirs = jax.random.normal(k2, (n_pts, 3), jnp.float32)
        roughness = jax.random.uniform(k3, (n_pts, 1), jnp.float32)
        r0 = jax.random.uniform(k4, (n_pts, 1), jnp.float32)

        diffuse_rgb, specular_rgb = ambient_reflection_net(
            normals, view_dirs, roughness, r0, packed,
            tile_n=tile_n, chunk_n=chunk_n)
        jax.block_until_ready((diffuse_rgb, specular_rgb))

        ref_d, ref_s = reference(normals, view_dirs, roughness, r0, params)
        assert diffuse_rgb.shape == (n_pts, 3)
        assert specular_rgb.shape == (n_pts, 3)
        assert jnp.allclose(diffuse_rgb, ref_d, atol=1e-5, rtol=1e-5)
        assert jnp.allclose(specular_rgb, ref_s, atol=1e-5, rtol=1e-5)

    # Also exercise the feature-major (layout-pass-free) entry point once.
    n_pts = 300
    key = jax.random.PRNGKey(0)
    k1, k2, k3, k4 = jax.random.split(key, 4)
    normals = jax.random.normal(k1, (n_pts, 3), jnp.float32)
    view_dirs = jax.random.normal(k2, (n_pts, 3), jnp.float32)
    roughness = jax.random.uniform(k3, (n_pts, 1), jnp.float32)
    r0 = jax.random.uniform(k4, (n_pts, 1), jnp.float32)
    x_fm = jnp.concatenate([normals.T, view_dirs.T, roughness.T, r0.T], axis=0)
    out_fm = ambient_reflection_net_fm(x_fm, packed)
    jax.block_until_ready(out_fm)
    ref_d, ref_s = reference(normals, view_dirs, roughness, r0, params)
    assert jnp.allclose(out_fm[0:3].T, ref_d, atol=1e-5, rtol=1e-5)
    assert jnp.allclose(out_fm[3:6].T, ref_s, atol=1e-5, rtol=1e-5)

    print("KERNEL_OK")
</pallas_src>

<mosaic_0001>
module attributes {stable_mosaic.version = 11 : i64} {
  func.func @ambient_reflection_kernel(%arg0: i32, %arg1: memref<8x384xf32, #tpu.memory_space<vmem>>, %arg2: memref<64x8xf32, #tpu.memory_space<vmem>>, %arg3: memref<64x1xf32, #tpu.memory_space<vmem>>, %arg4: memref<8x64xf32, #tpu.memory_space<vmem>>, %arg5: memref<8x1xf32, #tpu.memory_space<vmem>>, %arg6: memref<8x384xf32, #tpu.memory_space<vmem>>) attributes {dimension_semantics = [#tpu.dimension_semantics<parallel>], iteration_bounds = array<i64: 1>, scalar_prefetch = 0 : i64, scratch_operands = 0 : i64, tpu.core_type = #tpu.core_type<tc>, window_params = [{transform_indices = @transform_0, window_bounds = array<i64: 8, 384>}, {pipeline_mode = #tpu.pipeline_mode<synchronous>, transform_indices = @transform_1, window_bounds = array<i64: 64, 8>}, {pipeline_mode = #tpu.pipeline_mode<synchronous>, transform_indices = @transform_2, window_bounds = array<i64: 64, 1>}, {pipeline_mode = #tpu.pipeline_mode<synchronous>, transform_indices = @transform_3, window_bounds = array<i64: 8, 64>}, {pipeline_mode = #tpu.pipeline_mode<synchronous>, transform_indices = @transform_4, window_bounds = array<i64: 8, 1>}, {transform_indices = @transform_5, window_bounds = array<i64: 8, 384>}]} {
    %c0 = arith.constant 0 : index
    %c0_0 = arith.constant 0 : index
    %0 = vector.load %arg1[%c0, %c0_0] : memref<8x384xf32, #tpu.memory_space<vmem>>, vector<8x384xf32>
    %1 = vector.extract_strided_slice %0 {offsets = [0, 0], sizes = [3, 384], strides = [1, 1]} : vector<8x384xf32> to vector<3x384xf32>
    %2 = vector.extract_strided_slice %0 {offsets = [3, 0], sizes = [3, 384], strides = [1, 1]} : vector<8x384xf32> to vector<3x384xf32>
    %3 = arith.mulf %1, %1 : vector<3x384xf32>
    %cst = arith.constant dense<0.000000e+00> : vector<384xf32>
    %4 = vector.multi_reduction <add>, %3, %cst [0] : vector<3x384xf32> to vector<384xf32>
    %5 = vector.shape_cast %4 : vector<384xf32> to vector<1x384xf32>
    %6 = arith.mulf %2, %2 : vector<3x384xf32>
    %cst_1 = arith.constant dense<0.000000e+00> : vector<384xf32>
    %7 = vector.multi_reduction <add>, %6, %cst_1 [0] : vector<3x384xf32> to vector<384xf32>
    %8 = vector.shape_cast %7 : vector<384xf32> to vector<1x384xf32>
    %9 = arith.mulf %1, %2 : vector<3x384xf32>
    %cst_2 = arith.constant dense<0.000000e+00> : vector<384xf32>
    %10 = vector.multi_reduction <add>, %9, %cst_2 [0] : vector<3x384xf32> to vector<384xf32>
    %11 = vector.shape_cast %10 : vector<384xf32> to vector<1x384xf32>
    %cst_3 = arith.constant 1.000000e-24 : f32
    %12 = vector.broadcast %cst_3 : f32 to vector<1x384xf32>
    %13 = arith.maximumf %5, %12 : vector<1x384xf32>
    %14 = math.rsqrt %13 : vector<1x384xf32>
    %cst_4 = arith.constant 1.000000e-24 : f32
    %15 = vector.broadcast %cst_4 : f32 to vector<1x384xf32>
    %16 = arith.maximumf %8, %15 : vector<1x384xf32>
    %17 = math.rsqrt %16 : vector<1x384xf32>
    %18 = tpu.iota {dimensions = array<i32: 0>} : vector<8x384xi32>
    %c3_i32 = arith.constant 3 : i32
    %19 = vector.broadcast %c3_i32 : i32 to vector<8x384xi32>
    %20 = arith.cmpi slt, %18, %19 : vector<8x384xi32>
    %c6_i32 = arith.constant 6 : i32
    %21 = vector.broadcast %c6_i32 : i32 to vector<8x384xi32>
    %22 = arith.cmpi slt, %18, %21 : vector<8x384xi32>
    %cst_5 = arith.constant 1.000000e+00 : f32
    %23 = vector.shape_cast %17 : vector<1x384xf32> to vector<1x384xf32>
    %24 = vector.broadcast %23 : vector<1x384xf32> to vector<8x384xf32>
    %25 = vector.broadcast %cst_5 : f32 to vector<8x384xf32>
    %26 = arith.select %22, %24, %25 : vector<8x384xi1>, vector<8x384xf32>
    %27 = vector.shape_cast %14 : vector<1x384xf32> to vector<1x384xf32>
    %28 = vector.broadcast %27 : vector<1x384xf32> to vector<8x384xf32>
    %29 = arith.select %20, %28, %26 : vector<8x384xi1>, vector<8x384xf32>
    %30 = arith.mulf %0, %29 : vector<8x384xf32>
    %cst_6 = arith.constant 0.000000e+00 : f32
    %31 = vector.broadcast %cst_6 : f32 to vector<1x384xf32>
    %32 = arith.cmpf ogt, %11, %31 : vector<1x384xf32>
    %c0_7 = arith.constant 0 : index
    %c0_8 = arith.constant 0 : index
    %33 = vector.load %arg2[%c0_7, %c0_8] : memref<64x8xf32, #tpu.memory_space<vmem>>, vector<64x8xf32>
    %cst_9 = arith.constant dense<0.000000e+00> : vector<64x384xf32>
    %34 = tpu.matmul %33, %30, %cst_9 {dimension_numbers = #tpu.dot_dimension_numbers<[1], [0], [0], [1], [0, 0, 1, 1], [], []>} : vector<64x8xf32>, vector<8x384xf32>, vector<64x384xf32> -> vector<64x384xf32>
    %c0_10 = arith.constant 0 : index
    %c0_11 = arith.constant 0 : index
    %35 = vector.load %arg3[%c0_10, %c0_11] : memref<64x1xf32, #tpu.memory_space<vmem>>, vector<64x1xf32>
    %36 = vector.broadcast %35 : vector<64x1xf32> to vector<64x384xf32>
    %37 = arith.addf %34, %36 : vector<64x384xf32>
    %cst_12 = arith.constant 0.000000e+00 : f32
    %38 = vector.broadcast %cst_12 : f32 to vector<64x384xf32>
    %39 = arith.maximumf %37, %38 : vector<64x384xf32>
    %c0_13 = arith.constant 0 : index
    %c0_14 = arith.constant 0 : index
    %40 = vector.load %arg4[%c0_13, %c0_14] : memref<8x64xf32, #tpu.memory_space<vmem>>, vector<8x64xf32>
    %cst_15 = arith.constant dense<0.000000e+00> : vector<8x384xf32>
    %41 = tpu.matmul %40, %39, %cst_15 {dimension_numbers = #tpu.dot_dimension_numbers<[1], [0], [0], [1], [0, 0, 1, 1], [], []>} : vector<8x64xf32>, vector<64x384xf32>, vector<8x384xf32> -> vector<8x384xf32>
    %c0_16 = arith.constant 0 : index
    %c0_17 = arith.constant 0 : index
    %42 = vector.load %arg5[%c0_16, %c0_17] : memref<8x1xf32, #tpu.memory_space<vmem>>, vector<8x1xf32>
    %43 = vector.broadcast %42 : vector<8x1xf32> to vector<8x384xf32>
    %44 = arith.addf %41, %43 : vector<8x384xf32>
    %cst_18 = arith.constant 0.000000e+00 : f32
    %45 = vector.shape_cast %32 : vector<1x384xi1> to vector<1x384xi1>
    %46 = vector.broadcast %45 : vector<1x384xi1> to vector<8x384xi1>
    %47 = vector.broadcast %cst_18 : f32 to vector<8x384xf32>
    %48 = arith.select %46, %44, %47 : vector<8x384xi1>, vector<8x384xf32>
    %c0_19 = arith.constant 0 : index
    %c0_20 = arith.constant 0 : index
    %49 = vector.load %arg6[%c0_19, %c0_20] : memref<8x384xf32, #tpu.memory_space<vmem>>, vector<8x384xf32>
    tpu.vector_store %arg6[%c0_19, %c0_20], %48 {strides = array<i32>} : memref<8x384xf32, #tpu.memory_space<vmem>>, vector<8x384xf32>,
    return
  }
  func.func @transform_0(%arg0: i32) -> (i32, i32) {
    %c0_i32 = arith.constant 0 : i32
    %c0_i32_0 = arith.constant 0 : i32
    return %c0_i32, %arg0 : i32, i32
  }
  func.func @transform_1(%arg0: i32) -> (i32, i32) {
    %c0_i32 = arith.constant 0 : i32
    %c0_i32_0 = arith.constant 0 : i32
    %c0_i32_1 = arith.constant 0 : i32
    return %c0_i32, %c0_i32_0 : i32, i32
  }
  func.func @transform_2(%arg0: i32) -> (i32, i32) {
    %c0_i32 = arith.constant 0 : i32
    %c0_i32_0 = arith.constant 0 : i32
    %c0_i32_1 = arith.constant 0 : i32
    return %c0_i32, %c0_i32_0 : i32, i32
  }
  func.func @transform_3(%arg0: i32) -> (i32, i32) {
    %c0_i32 = arith.constant 0 : i32
    %c0_i32_0 = arith.constant 0 : i32
    %c0_i32_1 = arith.constant 0 : i32
    return %c0_i32, %c0_i32_0 : i32, i32
  }
  func.func @transform_4(%arg0: i32) -> (i32, i32) {
    %c0_i32 = arith.constant 0 : i32
    %c0_i32_0 = arith.constant 0 : i32
    %c0_i32_1 = arith.constant 0 : i32
    return %c0_i32, %c0_i32_0 : i32, i32
  }
  func.func @transform_5(%arg0: i32) -> (i32, i32) {
    %c0_i32 = arith.constant 0 : i32
    %c0_i32_0 = arith.constant 0 : i32
    return %c0_i32, %arg0 : i32, i32
  }
}

</mosaic_0001>

<llo_original>
// kernel: ambient_reflection_net.1
$region0: #{ambient_reflection_net.1}
  #allocation0 [shape = 'u32[]', space=smem, size = 0x4, offset = 0x4, fixed_abs, tag = 'smem constant byte address 0x4 - core index']
  #allocation1 [shape = 'u32[144,128]{1,0:T(1,128)}', space=vmem, size = 0x12000, scoped, tag = 'internal scratch']
  %s0 = inlined_call_operand.vmem [shape: f32[8,384], index: 0, kind: input, shape index: {}]
  %s1 = inlined_call_operand.vmem [shape: f32[64,8], index: 1, kind: input, shape index: {}]
  %s2 = inlined_call_operand.vmem [shape: f32[64,1], index: 2, kind: input, shape index: {}]
  %s3 = inlined_call_operand.vmem [shape: f32[8,64], index: 3, kind: input, shape index: {}]
  %s4 = inlined_call_operand.vmem [shape: f32[8,1], index: 4, kind: input, shape index: {}]
  %s5 = inlined_call_operand.vmem [shape: f32[8,384], index: 5, kind: output, shape index: {}]
  %s6 = sld [smem:[#allocation0]]
  $region30: #{ambient_reflection_net.1} parent=0
    _
  %s8 = ssub.s32 1, %s6
  %s9 = scalar_select 0, %s8, %s6
  // Predicated region
  $region2: #{ambient_reflection_net.1} parent=0 // pred_check
    _
  $region3: #{ambient_reflection_net.1} parent=0 // pred_check_branch
    %11 = sbr.rel (0) target = $region5
  $region4: #{ambient_reflection_net.1} parent=0 // pred_region
    _
  $region5: #{ambient_reflection_net.1} parent=0 // pred_fallthru
    _
  // Predicated region
  $region6: #{ambient_reflection_net.1} parent=0 // pred_check
    _
  $region7: #{ambient_reflection_net.1} parent=0 // pred_check_branch
    %13 = sbr.rel (0) target = $region9
  $region8: #{ambient_reflection_net.1} parent=0 // pred_region
    _
  $region9: #{ambient_reflection_net.1} parent=0 // pred_fallthru
    _
  // Predicated region
  $region10: #{ambient_reflection_net.1} parent=0 // pred_check
    _
  $region11: #{ambient_reflection_net.1} parent=0 // pred_check_branch
    %15 = sbr.rel (0) target = $region13
  $region12: #{ambient_reflection_net.1} parent=0 // pred_region
    _
  $region13: #{ambient_reflection_net.1} parent=0 // pred_fallthru
    _
  // Predicated region
  $region14: #{ambient_reflection_net.1} parent=0 // pred_check
    _
  $region15: #{ambient_reflection_net.1} parent=0 // pred_check_branch
    %17 = sbr.rel (0) target = $region17
  $region16: #{ambient_reflection_net.1} parent=0 // pred_region
    _
  $region17: #{ambient_reflection_net.1} parent=0 // pred_fallthru
    _
  // Predicated region
  $region18: #{ambient_reflection_net.1} parent=0 // pred_check
    _
  $region19: #{ambient_reflection_net.1} parent=0 // pred_check_branch
    %19 = sbr.rel (0) target = $region21
  $region20: #{ambient_reflection_net.1} parent=0 // pred_region
    _
  $region21: #{ambient_reflection_net.1} parent=0 // pred_fallthru
    _
  %v20 = vld [vmem:[%s0] sm:$0xff]
  %v21 = vld [vmem:[%s0 + $0x8] sm:$0xff]
  %v22 = vld [vmem:[%s0 + $0x10] sm:$0xff]
  %v23 = vmul.f32 %v20, %v20
  %v24 = vmul.f32 %v21, %v21
  %v25 = vmul.f32 %v22, %v22
  %vm26 = vcmask 1042432
  %v27 = vsel %vm26, %v23, 0.0
  %v28 = vrot.slane %v27, 4
  %v29 = vadd.f32 %v27, %v28
  %v30 = vrot.slane %v29, 2
  %v31 = vadd.f32 %v29, %v30
  %v32 = vrot.slane %v31, 1
  %v33 = vadd.f32 %v31, %v32
  %v34 = vsel %vm26, %v24, 0.0
  %v35 = vrot.slane %v34, 4
  %v36 = vadd.f32 %v34, %v35
  %v37 = vrot.slane %v36, 2
  %v38 = vadd.f32 %v36, %v37
  %v39 = vrot.slane %v38, 1
  %v40 = vadd.f32 %v38, %v39
  %v41 = vsel %vm26, %v25, 0.0
  %v42 = vrot.slane %v41, 4
  %v43 = vadd.f32 %v41, %v42
  %v44 = vrot.slane %v43, 2
  %v45 = vadd.f32 %v43, %v44
  %v46 = vrot.slane %v45, 1
  %v47 = vadd.f32 %v45, %v46
  %v51 = vrot.slane %v23, 3
  %v52 = vrot.slane %v24, 3
  %v53 = vrot.slane %v25, 3
  %v57 = vsel %vm26, %v51, 0.0
  %v58 = vrot.slane %v57, 4
  %v59 = vadd.f32 %v57, %v58
  %v60 = vrot.slane %v59, 2
  %v61 = vadd.f32 %v59, %v60
  %v62 = vrot.slane %v61, 1
  %v63 = vadd.f32 %v61, %v62
  %v64 = vsel %vm26, %v52, 0.0
  %v65 = vrot.slane %v64, 4
  %v66 = vadd.f32 %v64, %v65
  %v67 = vrot.slane %v66, 2
  %v68 = vadd.f32 %v66, %v67
  %v69 = vrot.slane %v68, 1
  %v70 = vadd.f32 %v68, %v69
  %v71 = vsel %vm26, %v53, 0.0
  %v72 = vrot.slane %v71, 4
  %v73 = vadd.f32 %v71, %v72
  %v74 = vrot.slane %v73, 2
  %v75 = vadd.f32 %v73, %v74
  %v76 = vrot.slane %v75, 1
  %v77 = vadd.f32 %v75, %v76
  %v81 = vrot.slane %v20, 3
  %v82 = vrot.slane %v21, 3
  %v83 = vrot.slane %v22, 3
  %v87 = vmul.f32 %v20, %v81
  %v88 = vmul.f32 %v21, %v82
  %v89 = vmul.f32 %v22, %v83
  %v90 = vsel %vm26, %v87, 0.0
  %v91 = vrot.slane %v90, 4
  %v92 = vadd.f32 %v90, %v91
  %v93 = vrot.slane %v92, 2
  %v94 = vadd.f32 %v92, %v93
  %v95 = vrot.slane %v94, 1
  %v96 = vadd.f32 %v94, %v95
  %v97 = vsel %vm26, %v88, 0.0
  %v98 = vrot.slane %v97, 4
  %v99 = vadd.f32 %v97, %v98
  %v100 = vrot.slane %v99, 2
  %v101 = vadd.f32 %v99, %v100
  %v102 = vrot.slane %v101, 1
  %v103 = vadd.f32 %v101, %v102
  %v104 = vsel %vm26, %v89, 0.0
  %v105 = vrot.slane %v104, 4
  %v106 = vadd.f32 %v104, %v105
  %v107 = vrot.slane %v106, 2
  %v108 = vadd.f32 %v106, %v107
  %v109 = vrot.slane %v108, 1
  %v110 = vadd.f32 %v108, %v109
  %v111 = vmax.f32 %v33, 1e-24
  %v112 = vmax.f32 %v40, 1e-24
  %v113 = vmax.f32 %v47, 1e-24
  %v114 = vrsqrt.pop %v111
  %v115 = vrsqrt.pop %v112
  %v116 = vrsqrt.pop %v113
  %v117 = vmax.f32 %v63, 1e-24
  %v118 = vmax.f32 %v70, 1e-24
  %v119 = vmax.f32 %v77, 1e-24
  %v120 = vrsqrt.pop %v117
  %v121 = vrsqrt.pop %v118
  %v122 = vrsqrt.pop %v119
  %v123 = vlaneseq
  %v124 = vshrl.u32 %v123, 7
  %vm125 = vcmp.lt.s32.totalorder %v124, 3
  %vm126 = vcmp.lt.s32.totalorder %v124, 6
  %v127 = vsel %vm126, %v120, 1.0
  %v128 = vsel %vm126, %v121, 1.0
  %v129 = vsel %vm126, %v122, 1.0
  %v130 = vsel %vm125, %v114, %v127
  %v131 = vsel %vm125, %v115, %v128
  %v132 = vsel %vm125, %v116, %v129
  %v133 = vmul.f32 %v20, %v130
  %v134 = vmul.f32 %v21, %v131
  %v135 = vmul.f32 %v22, %v132
  %vm136 = vcmp.gt.f32.partialorder %v96, 0.0
  %vm137 = vcmp.gt.f32.partialorder %v103, 0.0
  %vm138 = vcmp.gt.f32.partialorder %v110, 0.0
  %v139 = vld [vmem:[%s1] sm:$0xff]
  %v140 = vld [vmem:[%s1 + $0x8] sm:$0xff]
  %v141 = vld [vmem:[%s1 + $0x10] sm:$0xff]
  %v142 = vld [vmem:[%s1 + $0x18] sm:$0xff]
  %v143 = vld [vmem:[%s1 + $0x20] sm:$0xff]
  %v144 = vld [vmem:[%s1 + $0x28] sm:$0xff]
  %v145 = vld [vmem:[%s1 + $0x30] sm:$0xff]
  %v146 = vld [vmem:[%s1 + $0x38] sm:$0xff]
  %v147 = vld [vmem:[%s2] sm:$0xff]
  %v148 = vld [vmem:[%s2 + $0x8] sm:$0xff]
  %v149 = vld [vmem:[%s2 + $0x10] sm:$0xff]
  %v150 = vld [vmem:[%s2 + $0x18] sm:$0xff]
  %v151 = vld [vmem:[%s2 + $0x20] sm:$0xff]
  %v152 = vld [vmem:[%s2 + $0x28] sm:$0xff]
  %v153 = vld [vmem:[%s2 + $0x30] sm:$0xff]
  %v154 = vld [vmem:[%s2 + $0x38] sm:$0xff]
  %156 = vset.pattern.permute.xlu0 0
  %157 = vperm.xlu0 %156, %v147
  %v158 = vpop.permute.xlu0 %157
  %161 = vset.pattern.permute.xlu0 0
  %162 = vperm.xlu0 %161, %v148
  %v163 = vpop.permute.xlu0 %162
  %166 = vset.pattern.permute.xlu0 0
  %167 = vperm.xlu0 %166, %v149
  %v168 = vpop.permute.xlu0 %167
  %171 = vset.pattern.permute.xlu0 0
  %172 = vperm.xlu0 %171, %v150
  %v173 = vpop.permute.xlu0 %172
  %176 = vset.pattern.permute.xlu0 0
  %177 = vperm.xlu0 %176, %v151
  %v178 = vpop.permute.xlu0 %177
  %181 = vset.pattern.permute.xlu0 0
  %182 = vperm.xlu0 %181, %v152
  %v183 = vpop.permute.xlu0 %182
  %186 = vset.pattern.permute.xlu0 0
  %187 = vperm.xlu0 %186, %v153
  %v188 = vpop.permute.xlu0 %187
  %191 = vset.pattern.permute.xlu0 0
  %192 = vperm.xlu0 %191, %v154
  %v193 = vpop.permute.xlu0 %192
  %vm195 = vcmask 64512
  %v197 = vsel %vm195, %v139, 0
  %v200 = vsel %vm195, %v140, 0
  %v203 = vsel %vm195, %v141, 0
  %v206 = vsel %vm195, %v142, 0
  %v209 = vsel %vm195, %v143, 0
  %v212 = vsel %vm195, %v144, 0
  %v215 = vsel %vm195, %v145, 0
  %v218 = vsel %vm195, %v146, 0
  %220 = vmatprep.subr.mxu0 %v134
  %221 = vmatpush1.msra.mxu0 %v133
  %222 = vmatprep.subr.mxu0 0.0
  %223 = vmatpush1.msra.mxu0 0.0
  %224 = vmatprep.subr.mxu0 0.0
  %225 = vmatpush1.msra.mxu0 0.0
  %226 = vmatprep.subr.mxu0 0.0
  %227 = vmatpush1.msra.mxu0 0.0
  %228 = vmatprep.subr.mxu0 0.0
  %229 = vmatpush1.msra.mxu0 0.0
  %230 = vmatprep.subr.mxu0 0.0
  %231 = vmatpush1.msra.mxu0 0.0
  %232 = vmatprep.subr.mxu0 0.0
  %233 = vmatpush1.msra.mxu0 0.0
  %234 = vmatprep.subr.mxu0 0.0
  %235 = vmatpush1.msra.mxu0 0.0
  %236 = vmatprep.subr.mxu0 0.0
  %237 = vmatpush1.msra.mxu0 0.0
  %238 = vmatprep.subr.mxu0 0.0
  %239 = vmatpush1.msra.mxu0 0.0
  %240 = vmatprep.subr.mxu0 0.0
  %241 = vmatpush1.msra.mxu0 0.0
  %242 = vmatprep.subr.mxu0 0.0
  %243 = vmatpush1.msra.mxu0 0.0
  %244 = vmatprep.subr.mxu0 0.0
  %245 = vmatpush1.msra.mxu0 0.0
  %246 = vmatprep.subr.mxu0 0.0
  %247 = vmatpush1.msra.mxu0 0.0
  %248 = vmatprep.subr.mxu0 0.0
  %249 = vmatpush1.msra.mxu0 0.0
  %250 = vmatprep.subr.mxu0 0.0
  %251 = vmatpush1.msra.mxu0 0.0
  %252 = vmatprep.subr.mxu0 0.0
  %253 = vmatpush1.msra.mxu0 0.0
  %254 = vmatprep.subr.mxu0 0.0
  %255 = vmatpush1.msra.mxu0 0.0
  %256 = vmatprep.subr.mxu0 0.0
  %257 = vmatpush1.msra.mxu0 0.0
  %258 = vmatprep.subr.mxu0 0.0
  %259 = vmatpush1.msra.mxu0 0.0
  %260 = vmatprep.subr.mxu0 0.0
  %261 = vmatpush1.msra.mxu0 0.0
  %262 = vmatprep.subr.mxu0 0.0
  %263 = vmatpush1.msra.mxu0 0.0
  %264 = vmatprep.subr.mxu0 0.0
  %265 = vmatpush1.msra.mxu0 0.0
  %266 = vmatprep.subr.mxu0 0.0
  %267 = vmatpush1.msra.mxu0 0.0
  %268 = vmatprep.subr.mxu0 0.0
  %269 = vmatpush1.msra.mxu0 0.0
  %270 = vmatprep.subr.mxu0 0.0
  %271 = vmatpush1.msra.mxu0 0.0
  %272 = vmatprep.subr.mxu0 0.0
  %273 = vmatpush1.msra.mxu0 0.0
  %274 = vmatprep.subr.mxu0 0.0
  %275 = vmatpush1.msra.mxu0 0.0
  %276 = vmatprep.subr.mxu0 0.0
  %277 = vmatpush1.msra.mxu0 0.0
  %278 = vmatprep.subr.mxu0 0.0
  %279 = vmatpush1.msra.mxu0 0.0
  %280 = vmatprep.subr.mxu0 0.0
  %281 = vmatpush1.msra.mxu0 0.0
  %282 = vmatprep.subr.mxu0 0.0
  %283 = vmatpush1.msra.mxu0 0.0
  %284 = vmatprep.mubr.f32.mxu0 0.0
  %285 = vmatmul.mubr.f32.gmra.mrb[0].mxu0 %v197
  %v286 = vpop.f32.mrb[0].mxu0
  %v287 = vadd.f32 %v158, %v286
  %v288 = vpop.f32.mrb[0].mxu0
  %v289 = vadd.f32 %v158, %v288
  %290 = vmatprep.mubr.f32.mxu0 0.0
  %291 = vmatmul.mubr.f32.gmra.mrb[0].mxu0 %v200
  %v292 = vpop.f32.mrb[0].mxu0
  %v293 = vadd.f32 %v163, %v292
  %v294 = vpop.f32.mrb[0].mxu0
  %v295 = vadd.f32 %v163, %v294
  %296 = vmatprep.mubr.f32.mxu0 0.0
  %297 = vmatmul.mubr.f32.gmra.mrb[0].mxu0 %v203
  %v298 = vpop.f32.mrb[0].mxu0
  %v299 = vadd.f32 %v168, %v298
  %v300 = vpop.f32.mrb[0].mxu0
  %v301 = vadd.f32 %v168, %v300
  %302 = vmatprep.mubr.f32.mxu0 0.0
  %303 = vmatmul.mubr.f32.gmra.mrb[0].mxu0 %v206
  %v304 = vpop.f32.mrb[0].mxu0
  %v305 = vadd.f32 %v173, %v304
  %v306 = vpop.f32.mrb[0].mxu0
  %v307 = vadd.f32 %v173, %v306
  %308 = vmatprep.mubr.f32.mxu0 0.0
  %309 = vmatmul.mubr.f32.gmra.mrb[0].mxu0 %v209
  %v310 = vpop.f32.mrb[0].mxu0
  %v311 = vadd.f32 %v178, %v310
  %v312 = vpop.f32.mrb[0].mxu0
  %v313 = vadd.f32 %v178, %v312
  %314 = vmatprep.mubr.f32.mxu0 0.0
  %315 = vmatmul.mubr.f32.gmra.mrb[0].mxu0 %v212
  %v316 = vpop.f32.mrb[0].mxu0
  %v317 = vadd.f32 %v183, %v316
  %v318 = vpop.f32.mrb[0].mxu0
  %v319 = vadd.f32 %v183, %v318
  %320 = vmatprep.mubr.f32.mxu0 0.0
  %321 = vmatmul.mubr.f32.gmra.mrb[0].mxu0 %v215
  %v322 = vpop.f32.mrb[0].mxu0
  %v323 = vadd.f32 %v188, %v322
  %v324 = vpop.f32.mrb[0].mxu0
  %v325 = vadd.f32 %v188, %v324
  %326 = vmatprep.mubr.f32.mxu0 0.0
  %327 = vmatmul.mubr.f32.gmra.mrb[0].mxu0 %v218
  %v328 = vpop.f32.mrb[0].mxu0
  %v329 = vadd.f32 %v193, %v328
  %v330 = vpop.f32.mrb[0].mxu0
  %v331 = vadd.f32 %v193, %v330
  %332 = vdwg.mxu0
  %333 = vmatprep.subr.mxu0 0.0
  %334 = vmatpush1.msra.mxu0 %v135
  %335 = vmatprep.subr.mxu0 0.0
  %336 = vmatpush1.msra.mxu0 0.0
  %337 = vmatprep.subr.mxu0 0.0
  %338 = vmatpush1.msra.mxu0 0.0
  %339 = vmatprep.subr.mxu0 0.0
  %340 = vmatpush1.msra.mxu0 0.0
  %341 = vmatprep.subr.mxu0 0.0
  %342 = vmatpush1.msra.mxu0 0.0
  %343 = vmatprep.subr.mxu0 0.0
  %344 = vmatpush1.msra.mxu0 0.0
  %345 = vmatprep.subr.mxu0 0.0
  %346 = vmatpush1.msra.mxu0 0.0
  %347 = vmatprep.subr.mxu0 0.0
  %348 = vmatpush1.msra.mxu0 0.0
  %349 = vmatprep.subr.mxu0 0.0
  %350 = vmatpush1.msra.mxu0 0.0
  %351 = vmatprep.subr.mxu0 0.0
  %352 = vmatpush1.msra.mxu0 0.0
  %353 = vmatprep.subr.mxu0 0.0
  %354 = vmatpush1.msra.mxu0 0.0
  %355 = vmatprep.subr.mxu0 0.0
  %356 = vmatpush1.msra.mxu0 0.0
  %357 = vmatprep.subr.mxu0 0.0
  %358 = vmatpush1.msra.mxu0 0.0
  %359 = vmatprep.subr.mxu0 0.0
  %360 = vmatpush1.msra.mxu0 0.0
  %361 = vmatprep.subr.mxu0 0.0
  %362 = vmatpush1.msra.mxu0 0.0
  %363 = vmatprep.subr.mxu0 0.0
  %364 = vmatpush1.msra.mxu0 0.0
  %365 = vmatprep.subr.mxu0 0.0
  %366 = vmatpush1.msra.mxu0 0.0
  %367 = vmatprep.subr.mxu0 0.0
  %368 = vmatpush1.msra.mxu0 0.0
  %369 = vmatprep.subr.mxu0 0.0
  %370 = vmatpush1.msra.mxu0 0.0
  %371 = vmatprep.subr.mxu0 0.0
  %372 = vmatpush1.msra.mxu0 0.0
  %373 = vmatprep.subr.mxu0 0.0
  %374 = vmatpush1.msra.mxu0 0.0
  %375 = vmatprep.subr.mxu0 0.0
  %376 = vmatpush1.msra.mxu0 0.0
  %377 = vmatprep.subr.mxu0 0.0
  %378 = vmatpush1.msra.mxu0 0.0
  %379 = vmatprep.subr.mxu0 0.0
  %380 = vmatpush1.msra.mxu0 0.0
  %381 = vmatprep.subr.mxu0 0.0
  %382 = vmatpush1.msra.mxu0 0.0
  %383 = vmatprep.subr.mxu0 0.0
  %384 = vmatpush1.msra.mxu0 0.0
  %385 = vmatprep.subr.mxu0 0.0
  %386 = vmatpush1.msra.mxu0 0.0
  %387 = vmatprep.subr.mxu0 0.0
  %388 = vmatpush1.msra.mxu0 0.0
  %389 = vmatprep.subr.mxu0 0.0
  %390 = vmatpush1.msra.mxu0 0.0
  %391 = vmatprep.subr.mxu0 0.0
  %392 = vmatpush1.msra.mxu0 0.0
  %393 = vmatprep.subr.mxu0 0.0
  %394 = vmatpush1.msra.mxu0 0.0
  %395 = vmatprep.subr.mxu0 0.0
  %396 = vmatpush1.msra.mxu0 0.0
  %397 = vmatprep.mubr.f32.mxu0 0.0
  %398 = vmatmul.mubr.f32.gmra.mrb[0].mxu0 %v197
  %v399 = vpop.f32.mrb[0].mxu0
  %v400 = vadd.f32 %v158, %v399
  %v401 = vpop.f32.mrb[0].mxu0
  %402 = vmatprep.mubr.f32.mxu0 0.0
  %403 = vmatmul.mubr.f32.gmra.mrb[0].mxu0 %v200
  %v404 = vpop.f32.mrb[0].mxu0
  %v405 = vadd.f32 %v163, %v404
  %v406 = vpop.f32.mrb[0].mxu0
  %407 = vmatprep.mubr.f32.mxu0 0.0
  %408 = vmatmul.mubr.f32.gmra.mrb[0].mxu0 %v203
  %v409 = vpop.f32.mrb[0].mxu0
  %v410 = vadd.f32 %v168, %v409
  %v411 = vpop.f32.mrb[0].mxu0
  %412 = vmatprep.mubr.f32.mxu0 0.0
  %413 = vmatmul.mubr.f32.gmra.mrb[0].mxu0 %v206
  %v414 = vpop.f32.mrb[0].mxu0
  %v415 = vadd.f32 %v173, %v414
  %v416 = vpop.f32.mrb[0].mxu0
  %417 = vmatprep.mubr.f32.mxu0 0.0
  %418 = vmatmul.mubr.f32.gmra.mrb[0].mxu0 %v209
  %v419 = vpop.f32.mrb[0].mxu0
  %v420 = vadd.f32 %v178, %v419
  %v421 = vpop.f32.mrb[0].mxu0
  %422 = vmatprep.mubr.f32.mxu0 0.0
  %423 = vmatmul.mubr.f32.gmra.mrb[0].mxu0 %v212
  %v424 = vpop.f32.mrb[0].mxu0
  %v425 = vadd.f32 %v183, %v424
  %v426 = vpop.f32.mrb[0].mxu0
  %427 = vmatprep.mubr.f32.mxu0 0.0
  %428 = vmatmul.mubr.f32.gmra.mrb[0].mxu0 %v215
  %v429 = vpop.f32.mrb[0].mxu0
  %v430 = vadd.f32 %v188, %v429
  %v431 = vpop.f32.mrb[0].mxu0
  %432 = vmatprep.mubr.f32.mxu0 0.0
  %433 = vmatmul.mubr.f32.gmra.mrb[0].mxu0 %v218
  %v434 = vpop.f32.mrb[0].mxu0
  %v435 = vadd.f32 %v193, %v434
  %v436 = vpop.f32.mrb[0].mxu0
  %437 = vdwg.mxu0
  %v438 = vmax.f32 %v287, 0.0
  %v439 = vmax.f32 %v289, 0.0
  %v440 = vmax.f32 %v400, 0.0
  %v441 = vmax.f32 %v293, 0.0
  %v442 = vmax.f32 %v295, 0.0
  %v443 = vmax.f32 %v405, 0.0
  %v444 = vmax.f32 %v299, 0.0
  %v445 = vmax.f32 %v301, 0.0
  %v446 = vmax.f32 %v410, 0.0
  %v447 = vmax.f32 %v305, 0.0
  %v448 = vmax.f32 %v307, 0.0
  %v449 = vmax.f32 %v415, 0.0
  %v450 = vmax.f32 %v311, 0.0
  %v451 = vmax.f32 %v313, 0.0
  %v452 = vmax.f32 %v420, 0.0
  %v453 = vmax.f32 %v317, 0.0
  %v454 = vmax.f32 %v319, 0.0
  %v455 = vmax.f32 %v425, 0.0
  %v456 = vmax.f32 %v323, 0.0
  %v457 = vmax.f32 %v325, 0.0
  %v458 = vmax.f32 %v430, 0.0
  %v459 = vmax.f32 %v329, 0.0
  %v460 = vmax.f32 %v331, 0.0
  %v461 = vmax.f32 %v435, 0.0
  %v462 = vld [vmem:[%s3] sm:$0xff]
  %v463 = vld [vmem:[%s4] sm:$0xff]
  %465 = vset.pattern.permute.xlu0 0
  %466 = vperm.xlu0 %465, %v463
  %v467 = vpop.permute.xlu0 %466
  %vm469 = vcmask 523264
  %v471 = vsel %vm469, %v462, 0
  %473 = vmatprep.subr.mxu0 %v439
  %474 = vmatpush1.msra.mxu0 %v438
  %475 = vmatprep.subr.mxu0 %v442
  %476 = vmatpush1.msra.mxu0 %v441
  %477 = vmatprep.subr.mxu0 %v445
  %478 = vmatpush1.msra.mxu0 %v444
  %479 = vmatprep.subr.mxu0 %v448
  %480 = vmatpush1.msra.mxu0 %v447
  %481 = vmatprep.subr.mxu0 %v451
  %482 = vmatpush1.msra.mxu0 %v450
  %483 = vmatprep.subr.mxu0 %v454
  %484 = vmatpush1.msra.mxu0 %v453
  %485 = vmatprep.subr.mxu0 %v457
  %486 = vmatpush1.msra.mxu0 %v456
  %487 = vmatprep.subr.mxu0 %v460
  %488 = vmatpush1.msra.mxu0 %v459
  %489 = vmatprep.subr.mxu0 0.0
  %490 = vmatpush1.msra.mxu0 0.0
  %491 = vmatprep.subr.mxu0 0.0
  %492 = vmatpush1.msra.mxu0 0.0
  %493 = vmatprep.subr.mxu0 0.0
  %494 = vmatpush1.msra.mxu0 0.0
  %495 = vmatprep.subr.mxu0 0.0
  %496 = vmatpush1.msra.mxu0 0.0
  %497 = vmatprep.subr.mxu0 0.0
  %498 = vmatpush1.msra.mxu0 0.0
  %499 = vmatprep.subr.mxu0 0.0
  %500 = vmatpush1.msra.mxu0 0.0
  %501 = vmatprep.subr.mxu0 0.0
  %502 = vmatpush1.msra.mxu0 0.0
  %503 = vmatprep.subr.mxu0 0.0
  %504 = vmatpush1.msra.mxu0 0.0
  %505 = vmatprep.subr.mxu0 0.0
  %506 = vmatpush1.msra.mxu0 0.0
  %507 = vmatprep.subr.mxu0 0.0
  %508 = vmatpush1.msra.mxu0 0.0
  %509 = vmatprep.subr.mxu0 0.0
  %510 = vmatpush1.msra.mxu0 0.0
  %511 = vmatprep.subr.mxu0 0.0
  %512 = vmatpush1.msra.mxu0 0.0
  %513 = vmatprep.subr.mxu0 0.0
  %514 = vmatpush1.msra.mxu0 0.0
  %515 = vmatprep.subr.mxu0 0.0
  %516 = vmatpush1.msra.mxu0 0.0
  %517 = vmatprep.subr.mxu0 0.0
  %518 = vmatpush1.msra.mxu0 0.0
  %519 = vmatprep.subr.mxu0 0.0
  %520 = vmatpush1.msra.mxu0 0.0
  %521 = vmatprep.subr.mxu0 0.0
  %522 = vmatpush1.msra.mxu0 0.0
  %523 = vmatprep.subr.mxu0 0.0
  %524 = vmatpush1.msra.mxu0 0.0
  %525 = vmatprep.subr.mxu0 0.0
  %526 = vmatpush1.msra.mxu0 0.0
  %527 = vmatprep.subr.mxu0 0.0
  %528 = vmatpush1.msra.mxu0 0.0
  %529 = vmatprep.subr.mxu0 0.0
  %530 = vmatpush1.msra.mxu0 0.0
  %531 = vmatprep.subr.mxu0 0.0
  %532 = vmatpush1.msra.mxu0 0.0
  %533 = vmatprep.subr.mxu0 0.0
  %534 = vmatpush1.msra.mxu0 0.0
  %535 = vmatprep.subr.mxu0 0.0
  %536 = vmatpush1.msra.mxu0 0.0
  %537 = vmatprep.mubr.f32.mxu0 0.0
  %538 = vmatmul.mubr.f32.gmra.mrb[0].mxu0 %v471
  %v539 = vpop.f32.mrb[0].mxu0
  %v540 = vadd.f32 %v467, %v539
  %v541 = vpop.f32.mrb[0].mxu0
  %v542 = vadd.f32 %v467, %v541
  %543 = vdwg.mxu0
  %544 = vmatprep.subr.mxu0 0.0
  %545 = vmatpush1.msra.mxu0 %v440
  %546 = vmatprep.subr.mxu0 0.0
  %547 = vmatpush1.msra.mxu0 %v443
  %548 = vmatprep.subr.mxu0 0.0
  %549 = vmatpush1.msra.mxu0 %v446
  %550 = vmatprep.subr.mxu0 0.0
  %551 = vmatpush1.msra.mxu0 %v449
  %552 = vmatprep.subr.mxu0 0.0
  %553 = vmatpush1.msra.mxu0 %v452
  %554 = vmatprep.subr.mxu0 0.0
  %555 = vmatpush1.msra.mxu0 %v455
  %556 = vmatprep.subr.mxu0 0.0
  %557 = vmatpush1.msra.mxu0 %v458
  %558 = vmatprep.subr.mxu0 0.0
  %559 = vmatpush1.msra.mxu0 %v461
  %560 = vmatprep.subr.mxu0 0.0
  %561 = vmatpush1.msra.mxu0 0.0
  %562 = vmatprep.subr.mxu0 0.0
  %563 = vmatpush1.msra.mxu0 0.0
  %564 = vmatprep.subr.mxu0 0.0
  %565 = vmatpush1.msra.mxu0 0.0
  %566 = vmatprep.subr.mxu0 0.0
  %567 = vmatpush1.msra.mxu0 0.0
  %568 = vmatprep.subr.mxu0 0.0
  %569 = vmatpush1.msra.mxu0 0.0
  %570 = vmatprep.subr.mxu0 0.0
  %571 = vmatpush1.msra.mxu0 0.0
  %572 = vmatprep.subr.mxu0 0.0
  %573 = vmatpush1.msra.mxu0 0.0
  %574 = vmatprep.subr.mxu0 0.0
  %575 = vmatpush1.msra.mxu0 0.0
  %576 = vmatprep.subr.mxu0 0.0
  %577 = vmatpush1.msra.mxu0 0.0
  %578 = vmatprep.subr.mxu0 0.0
  %579 = vmatpush1.msra.mxu0 0.0
  %580 = vmatprep.subr.mxu0 0.0
  %581 = vmatpush1.msra.mxu0 0.0
  %582 = vmatprep.subr.mxu0 0.0
  %583 = vmatpush1.msra.mxu0 0.0
  %584 = vmatprep.subr.mxu0 0.0
  %585 = vmatpush1.msra.mxu0 0.0
  %586 = vmatprep.subr.mxu0 0.0
  %587 = vmatpush1.msra.mxu0 0.0
  %588 = vmatprep.subr.mxu0 0.0
  %589 = vmatpush1.msra.mxu0 0.0
  %590 = vmatprep.subr.mxu0 0.0
  %591 = vmatpush1.msra.mxu0 0.0
  %592 = vmatprep.subr.mxu0 0.0
  %593 = vmatpush1.msra.mxu0 0.0
  %594 = vmatprep.subr.mxu0 0.0
  %595 = vmatpush1.msra.mxu0 0.0
  %596 = vmatprep.subr.mxu0 0.0
  %597 = vmatpush1.msra.mxu0 0.0
  %598 = vmatprep.subr.mxu0 0.0
  %599 = vmatpush1.msra.mxu0 0.0
  %600 = vmatprep.subr.mxu0 0.0
  %601 = vmatpush1.msra.mxu0 0.0
  %602 = vmatprep.subr.mxu0 0.0
  %603 = vmatpush1.msra.mxu0 0.0
  %604 = vmatprep.subr.mxu0 0.0
  %605 = vmatpush1.msra.mxu0 0.0
  %606 = vmatprep.subr.mxu0 0.0
  %607 = vmatpush1.msra.mxu0 0.0
  %608 = vmatprep.mubr.f32.mxu0 0.0
  %609 = vmatmul.mubr.f32.gmra.mrb[0].mxu0 %v471
  %v610 = vpop.f32.mrb[0].mxu0
  %v611 = vadd.f32 %v467, %v610
  %v612 = vpop.f32.mrb[0].mxu0
  %613 = vdwg.mxu0
  %v614 = vsel %vm136, 1, 0
  %v615 = vsel %vm137, 1, 0
  %v616 = vsel %vm138, 1, 0
  %vm617 = vcmp.eq.s32.totalorder %v614, 1
  %vm618 = vcmp.eq.s32.totalorder %v615, 1
  %vm619 = vcmp.eq.s32.totalorder %v616, 1
  %v620 = vsel %vm617, %v540, 0.0
  %v621 = vsel %vm618, %v542, 0.0
  %v622 = vsel %vm619, %v611, 0.0
  %623 = vst [vmem:[%s5] sm:$0xff] %v620
  %624 = vst [vmem:[%s5 + $0x8] sm:$0xff] %v621
  %625 = vst [vmem:[%s5 + $0x10] sm:$0xff] %v622
  // Predicated region
  $region22: #{ambient_reflection_net.1} parent=0 // pred_check
    _
  $region23: #{ambient_reflection_net.1} parent=0 // pred_check_branch
    %627 = sbr.rel (0) target = $region25
  $region24: #{ambient_reflection_net.1} parent=0 // pred_region
    _
  $region25: #{ambient_reflection_net.1} parent=0 // pred_fallthru
    _
  // Predicated region
  $region26: #{ambient_reflection_net.1} parent=0 // pred_check
    _
  $region27: #{ambient_reflection_net.1} parent=0 // pred_check_branch
    %629 = sbr.rel (0) target = $region29
  $region28: #{ambient_reflection_net.1} parent=0 // pred_region
    _
  $region29: #{ambient_reflection_net.1} parent=0 // pred_fallthru
    _

</llo_original>
